<compile_context>
chip_gen: v7x
topology: tpu7x:2x2x1
jax: 0.10.0
libtpu: 0.0.40
codegen_flags: <defaults>
</compile_context>

<pallas_src>
import jax
import jax.numpy as jnp
from jax.experimental import pallas as pl
from jax.experimental.pallas import tpu as pltpu


def _round_up(n, m):
    return ((n + m - 1) // m) * m


def film_kernel(x_ref, te_ref, wg_ref, bg_ref, wb_ref, bb_ref, o_ref):
    # x_ref: [TB, F]   te_ref: [TB, T]
    # wg_ref/wb_ref: [T, F] (resident)   bg_ref/bb_ref: [1, F] (resident)
    te = te_ref[...]
    gamma = jnp.dot(te, wg_ref[...], preferred_element_type=jnp.float32) + bg_ref[...]
    beta = jnp.dot(te, wb_ref[...], preferred_element_type=jnp.float32) + bb_ref[...]
    o_ref[...] = (gamma * x_ref[...].astype(jnp.float32) + beta).astype(o_ref.dtype)


def _vmem_capacity_bytes():
    try:
        info = pltpu.get_tpu_info()
        cap = int(getattr(info, "vmem_capacity_bytes", 0))
        if cap > 0:
            return cap
    except Exception:
        pass
    return 64 << 20  # conservative fallback (v7x per-TC VMEM)


def _pick_batch_tile(B, F, T, itemsize, vmem_cap):
    # Dtype-aware sublane multiple: 8 for 4-byte, 16 for 2-byte, 32 for 1-byte.
    sub = {4: 8, 2: 16, 1: 32}.get(itemsize, 8)

    # Per-batch-row VMEM footprint: double-buffered x/out/te streams plus
    # ~3 f32 kernel-internal temporaries (gamma, beta, product).
    per_row = 2 * F * itemsize + 2 * F * itemsize + 2 * T * itemsize + 3 * F * 4
    weights_bytes = 2 * T * F * 4 + 2 * F * 4  # resident, single-buffered

    budget = int(0.55 * vmem_cap) - weights_bytes
    tb_vmem = max(sub, budget // per_row)

    # Big-enough tile to amortize ~0.35us/grid-step, but keep >= ~4 grid
    # steps for megacore when that doesn't shrink tiles below the target.
    tb_target = max(sub, (4 << 20) // max(1, F * itemsize))
    TB = min(tb_vmem, _round_up(B, sub))
    tb_mega = _round_up(pl.cdiv(B, 4), sub)
    if tb_mega >= tb_target:
        TB = min(TB, tb_mega)
    TB = max(sub, (TB // sub) * sub)

    needed = weights_bytes + TB * per_row
    vmem_limit = int(min(max(32 << 20, needed + needed // 4),
                         max(32 << 20, vmem_cap - (8 << 20))))
    return TB, vmem_limit


def _film_call(B, F, T, TB, vmem_limit, out_dtype, single_buffer_weights):
    resident = {"pipeline_mode": pl.Buffered(1)} if single_buffer_weights else {}
    in_specs = [
        pl.BlockSpec((TB, F), lambda i: (i, 0)),              # x (streamed)
        pl.BlockSpec((TB, T), lambda i: (i, 0)),              # task_embedding (streamed)
        pl.BlockSpec((T, F), lambda i: (0, 0), **resident),   # Wg (resident)
        pl.BlockSpec((1, F), lambda i: (0, 0), **resident),   # bg (resident)
        pl.BlockSpec((T, F), lambda i: (0, 0), **resident),   # Wb (resident)
        pl.BlockSpec((1, F), lambda i: (0, 0), **resident),   # bb (resident)
    ]
    return pl.pallas_call(
        film_kernel,
        out_shape=jax.ShapeDtypeStruct((B, F), out_dtype),
        grid=(pl.cdiv(B, TB),),                # ragged batch tail masked by Pallas
        in_specs=in_specs,
        out_specs=pl.BlockSpec((TB, F), lambda i: (i, 0)),
        compiler_params=pltpu.CompilerParams(
            dimension_semantics=("parallel",),
            vmem_limit_bytes=vmem_limit,
        ),
    )


def film(x, task_embedding, wg, bg, wb, bb):
    """FiLM forward: (te @ wg + bg) * x + (te @ wb + bb).

    x:              [B, F]
    task_embedding: [B, T]
    wg, wb:         [T, F]   (transpose of PyTorch nn.Linear weight)
    bg, bb:         [F] or [1, F]
    """
    B, F = x.shape
    T = task_embedding.shape[1]
    bg = jnp.asarray(bg).reshape(1, F)
    bb = jnp.asarray(bb).reshape(1, F)

    itemsize = jnp.dtype(x.dtype).itemsize
    TB, vmem_limit = _pick_batch_tile(B, F, T, itemsize, _vmem_capacity_bytes())

    args = (x, task_embedding, wg, bg, wb, bb)
    try:
        return _film_call(B, F, T, TB, vmem_limit, x.dtype, True)(*args)
    except Exception:
        # Fallback: default double-buffering for the resident weights/biases.
        return _film_call(B, F, T, TB, vmem_limit, x.dtype, False)(*args)


def film_ref(x, task_embedding, wg, bg, wb, bb):
    gamma = task_embedding @ wg + jnp.asarray(bg).reshape(1, -1)
    beta = task_embedding @ wb + jnp.asarray(bb).reshape(1, -1)
    return gamma * x + beta


if __name__ == "__main__":
    def make_inputs(key, B, F, T, dtype=jnp.float32):
        k_x, k_te, k_wg, k_bg, k_wb, k_bb = jax.random.split(key, 6)
        bound = 1.0 / (T ** 0.5)
        x = jax.random.normal(k_x, (B, F), dtype=dtype)
        te = jax.random.normal(k_te, (B, T), dtype=dtype)
        wg = jax.random.uniform(k_wg, (T, F), jnp.float32, -bound, bound)
        bg = jax.random.uniform(k_bg, (F,), jnp.float32, -bound, bound)
        wb = jax.random.uniform(k_wb, (T, F), jnp.float32, -bound, bound)
        bb = jax.random.uniform(k_bb, (F,), jnp.float32, -bound, bound)
        return x, te, wg, bg, wb, bb

    k1, k2 = jax.random.split(jax.random.PRNGKey(0))

    # Case 1: aligned shapes implied by the module (batch=8, F=128, T=32).
    args = make_inputs(k1, B=8, F=128, T=32)
    out = jax.block_until_ready(film(*args))
    exp = film_ref(*args)
    assert out.shape == (8, 128)
    assert jnp.allclose(out, exp, atol=1e-5, rtol=1e-5), "mismatch (aligned case)"

    # Case 2: ragged batch + non-128-multiple feature dim (no padding, no
    # slicing; Pallas masks the partial tail block).
    args2 = make_inputs(k2, B=13, F=96, T=32)
    out2 = jax.block_until_ready(film(*args2))
    exp2 = film_ref(*args2)
    assert out2.shape == (13, 96)
    assert jnp.allclose(out2, exp2, atol=1e-5, rtol=1e-5), "mismatch (ragged case)"

    print("KERNEL_OK")
</pallas_src>

<mosaic_0001>
module attributes {stable_mosaic.version = 11 : i64} {
  func.func @film_kernel(%arg0: i32, %arg1: memref<8x128xf32, #tpu.memory_space<vmem>>, %arg2: memref<8x32xf32, #tpu.memory_space<vmem>>, %arg3: memref<32x128xf32, #tpu.memory_space<vmem>>, %arg4: memref<1x128xf32, #tpu.memory_space<vmem>>, %arg5: memref<32x128xf32, #tpu.memory_space<vmem>>, %arg6: memref<1x128xf32, #tpu.memory_space<vmem>>, %arg7: memref<8x128xf32, #tpu.memory_space<vmem>>) attributes {dimension_semantics = [#tpu.dimension_semantics<parallel>], iteration_bounds = array<i64: 1>, scalar_prefetch = 0 : i64, scratch_operands = 0 : i64, tpu.core_type = #tpu.core_type<tc>, window_params = [{transform_indices = @transform_0, window_bounds = array<i64: 8, 128>}, {transform_indices = @transform_1, window_bounds = array<i64: 8, 32>}, {pipeline_mode = #tpu.pipeline_mode<synchronous>, transform_indices = @transform_2, window_bounds = array<i64: 32, 128>}, {pipeline_mode = #tpu.pipeline_mode<synchronous>, transform_indices = @transform_3, window_bounds = array<i64: 1, 128>}, {pipeline_mode = #tpu.pipeline_mode<synchronous>, transform_indices = @transform_4, window_bounds = array<i64: 32, 128>}, {pipeline_mode = #tpu.pipeline_mode<synchronous>, transform_indices = @transform_5, window_bounds = array<i64: 1, 128>}, {transform_indices = @transform_6, window_bounds = array<i64: 8, 128>}]} {
    %c0 = arith.constant 0 : index
    %c0_0 = arith.constant 0 : index
    %0 = vector.load %arg2[%c0, %c0_0] : memref<8x32xf32, #tpu.memory_space<vmem>>, vector<8x32xf32>
    %c0_1 = arith.constant 0 : index
    %c0_2 = arith.constant 0 : index
    %1 = vector.load %arg3[%c0_1, %c0_2] : memref<32x128xf32, #tpu.memory_space<vmem>>, vector<32x128xf32>
    %cst = arith.constant dense<0.000000e+00> : vector<8x128xf32>
    %2 = tpu.matmul %0, %1, %cst {dimension_numbers = #tpu.dot_dimension_numbers<[1], [0], [0], [1], [0, 0, 1, 1], [], []>} : vector<8x32xf32>, vector<32x128xf32>, vector<8x128xf32> -> vector<8x128xf32>
    %c0_3 = arith.constant 0 : index
    %c0_4 = arith.constant 0 : index
    %3 = vector.load %arg4[%c0_3, %c0_4] : memref<1x128xf32, #tpu.memory_space<vmem>>, vector<1x128xf32>
    %4 = vector.broadcast %3 : vector<1x128xf32> to vector<8x128xf32>
    %5 = arith.addf %2, %4 : vector<8x128xf32>
    %c0_5 = arith.constant 0 : index
    %c0_6 = arith.constant 0 : index
    %6 = vector.load %arg5[%c0_5, %c0_6] : memref<32x128xf32, #tpu.memory_space<vmem>>, vector<32x128xf32>
    %cst_7 = arith.constant dense<0.000000e+00> : vector<8x128xf32>
    %7 = tpu.matmul %0, %6, %cst_7 {dimension_numbers = #tpu.dot_dimension_numbers<[1], [0], [0], [1], [0, 0, 1, 1], [], []>} : vector<8x32xf32>, vector<32x128xf32>, vector<8x128xf32> -> vector<8x128xf32>
    %c0_8 = arith.constant 0 : index
    %c0_9 = arith.constant 0 : index
    %8 = vector.load %arg6[%c0_8, %c0_9] : memref<1x128xf32, #tpu.memory_space<vmem>>, vector<1x128xf32>
    %9 = vector.broadcast %8 : vector<1x128xf32> to vector<8x128xf32>
    %10 = arith.addf %7, %9 : vector<8x128xf32>
    %c0_10 = arith.constant 0 : index
    %c0_11 = arith.constant 0 : index
    %11 = vector.load %arg1[%c0_10, %c0_11] : memref<8x128xf32, #tpu.memory_space<vmem>>, vector<8x128xf32>
    %12 = arith.mulf %5, %11 : vector<8x128xf32>
    %13 = arith.addf %12, %10 : vector<8x128xf32>
    %c0_12 = arith.constant 0 : index
    %c0_13 = arith.constant 0 : index
    %14 = vector.load %arg7[%c0_12, %c0_13] : memref<8x128xf32, #tpu.memory_space<vmem>>, vector<8x128xf32>
    tpu.vector_store %arg7[%c0_12, %c0_13], %13 {strides = array<i32>} : memref<8x128xf32, #tpu.memory_space<vmem>>, vector<8x128xf32>,
    return
  }
  func.func @transform_0(%arg0: i32) -> (i32, i32) {
    %c0_i32 = arith.constant 0 : i32
    %c0_i32_0 = arith.constant 0 : i32
    return %arg0, %c0_i32 : i32, i32
  }
  func.func @transform_1(%arg0: i32) -> (i32, i32) {
    %c0_i32 = arith.constant 0 : i32
    %c0_i32_0 = arith.constant 0 : i32
    return %arg0, %c0_i32 : i32, i32
  }
  func.func @transform_2(%arg0: i32) -> (i32, i32) {
    %c0_i32 = arith.constant 0 : i32
    %c0_i32_0 = arith.constant 0 : i32
    %c0_i32_1 = arith.constant 0 : i32
    return %c0_i32, %c0_i32_0 : i32, i32
  }
  func.func @transform_3(%arg0: i32) -> (i32, i32) {
    %c0_i32 = arith.constant 0 : i32
    %c0_i32_0 = arith.constant 0 : i32
    %c0_i32_1 = arith.constant 0 : i32
    return %c0_i32, %c0_i32_0 : i32, i32
  }
  func.func @transform_4(%arg0: i32) -> (i32, i32) {
    %c0_i32 = arith.constant 0 : i32
    %c0_i32_0 = arith.constant 0 : i32
    %c0_i32_1 = arith.constant 0 : i32
    return %c0_i32, %c0_i32_0 : i32, i32
  }
  func.func @transform_5(%arg0: i32) -> (i32, i32) {
    %c0_i32 = arith.constant 0 : i32
    %c0_i32_0 = arith.constant 0 : i32
    %c0_i32_1 = arith.constant 0 : i32
    return %c0_i32, %c0_i32_0 : i32, i32
  }
  func.func @transform_6(%arg0: i32) -> (i32, i32) {
    %c0_i32 = arith.constant 0 : i32
    %c0_i32_0 = arith.constant 0 : i32
    return %arg0, %c0_i32 : i32, i32
  }
}

module attributes {stable_mosaic.version = 11 : i64} {
  func.func @film_kernel(%arg0: i32, %arg1: memref<8x128xf32, #tpu.memory_space<vmem>>, %arg2: memref<8x32xf32, #tpu.memory_space<vmem>>, %arg3: memref<32x128xf32, #tpu.memory_space<vmem>>, %arg4: memref<1x128xf32, #tpu.memory_space<vmem>>, %arg5: memref<32x128xf32, #tpu.memory_space<vmem>>, %arg6: memref<1x128xf32, #tpu.memory_space<vmem>>, %arg7: memref<8x128xf32, #tpu.memory_space<vmem>>) attributes {dimension_semantics = [#tpu.dimension_semantics<parallel>], iteration_bounds = array<i64: 1>, scalar_prefetch = 0 : i64, scratch_operands = 0 : i64, tpu.core_type = #tpu.core_type<tc>, window_params = [{transform_indices = @transform_0, window_bounds = array<i64: 8, 128>}, {transform_indices = @transform_1, window_bounds = array<i64: 8, 32>}, {pipeline_mode = #tpu.pipeline_mode<synchronous>, transform_indices = @transform_2, window_bounds = array<i64: 32, 128>}, {pipeline_mode = #tpu.pipeline_mode<synchronous>, transform_indices = @transform_3, window_bounds = array<i64: 1, 128>}, {pipeline_mode = #tpu.pipeline_mode<synchronous>, transform_indices = @transform_4, window_bounds = array<i64: 32, 128>}, {pipeline_mode = #tpu.pipeline_mode<synchronous>, transform_indices = @transform_5, window_bounds = array<i64: 1, 128>}, {transform_indices = @transform_6, window_bounds = array<i64: 8, 128>}]} {
    %c0 = arith.constant 0 : index
    %c0_0 = arith.constant 0 : index
    %0 = vector.load %arg2[%c0, %c0_0] : memref<8x32xf32, #tpu.memory_space<vmem>>, vector<8x32xf32>
    %c0_1 = arith.constant 0 : index
    %c0_2 = arith.constant 0 : index
    %1 = vector.load %arg3[%c0_1, %c0_2] : memref<32x128xf32, #tpu.memory_space<vmem>>, vector<32x128xf32>
    %cst = arith.constant dense<0.000000e+00> : vector<8x128xf32>
    %2 = tpu.matmul %0, %1, %cst {dimension_numbers = #tpu.dot_dimension_numbers<[1], [0], [0], [1], [0, 0, 1, 1], [], []>} : vector<8x32xf32>, vector<32x128xf32>, vector<8x128xf32> -> vector<8x128xf32>
    %c0_3 = arith.constant 0 : index
    %c0_4 = arith.constant 0 : index
    %3 = vector.load %arg4[%c0_3, %c0_4] : memref<1x128xf32, #tpu.memory_space<vmem>>, vector<1x128xf32>
    %4 = vector.broadcast %3 : vector<1x128xf32> to vector<8x128xf32>
    %5 = arith.addf %2, %4 : vector<8x128xf32>
    %c0_5 = arith.constant 0 : index
    %c0_6 = arith.constant 0 : index
    %6 = vector.load %arg5[%c0_5, %c0_6] : memref<32x128xf32, #tpu.memory_space<vmem>>, vector<32x128xf32>
    %cst_7 = arith.constant dense<0.000000e+00> : vector<8x128xf32>
    %7 = tpu.matmul %0, %6, %cst_7 {dimension_numbers = #tpu.dot_dimension_numbers<[1], [0], [0], [1], [0, 0, 1, 1], [], []>} : vector<8x32xf32>, vector<32x128xf32>, vector<8x128xf32> -> vector<8x128xf32>
    %c0_8 = arith.constant 0 : index
    %c0_9 = arith.constant 0 : index
    %8 = vector.load %arg6[%c0_8, %c0_9] : memref<1x128xf32, #tpu.memory_space<vmem>>, vector<1x128xf32>
    %9 = vector.broadcast %8 : vector<1x128xf32> to vector<8x128xf32>
    %10 = arith.addf %7, %9 : vector<8x128xf32>
    %c0_10 = arith.constant 0 : index
    %c0_11 = arith.constant 0 : index
    %11 = vector.load %arg1[%c0_10, %c0_11] : memref<8x128xf32, #tpu.memory_space<vmem>>, vector<8x128xf32>
    %12 = arith.mulf %5, %11 : vector<8x128xf32>
    %13 = arith.addf %12, %10 : vector<8x128xf32>
    %c0_12 = arith.constant 0 : index
    %c0_13 = arith.constant 0 : index
    %14 = vector.load %arg7[%c0_12, %c0_13] : memref<8x128xf32, #tpu.memory_space<vmem>>, vector<8x128xf32>
    tpu.vector_store %arg7[%c0_12, %c0_13], %13 {strides = array<i32>} : memref<8x128xf32, #tpu.memory_space<vmem>>, vector<8x128xf32>,
    return
  }
  func.func @transform_0(%arg0: i32) -> (i32, i32) {
    %c0_i32 = arith.constant 0 : i32
    %c0_i32_0 = arith.constant 0 : i32
    return %arg0, %c0_i32 : i32, i32
  }
  func.func @transform_1(%arg0: i32) -> (i32, i32) {
    %c0_i32 = arith.constant 0 : i32
    %c0_i32_0 = arith.constant 0 : i32
    return %arg0, %c0_i32 : i32, i32
  }
  func.func @transform_2(%arg0: i32) -> (i32, i32) {
    %c0_i32 = arith.constant 0 : i32
    %c0_i32_0 = arith.constant 0 : i32
    %c0_i32_1 = arith.constant 0 : i32
    return %c0_i32, %c0_i32_0 : i32, i32
  }
  func.func @transform_3(%arg0: i32) -> (i32, i32) {
    %c0_i32 = arith.constant 0 : i32
    %c0_i32_0 = arith.constant 0 : i32
    %c0_i32_1 = arith.constant 0 : i32
    return %c0_i32, %c0_i32_0 : i32, i32
  }
  func.func @transform_4(%arg0: i32) -> (i32, i32) {
    %c0_i32 = arith.constant 0 : i32
    %c0_i32_0 = arith.constant 0 : i32
    %c0_i32_1 = arith.constant 0 : i32
    return %c0_i32, %c0_i32_0 : i32, i32
  }
  func.func @transform_5(%arg0: i32) -> (i32, i32) {
    %c0_i32 = arith.constant 0 : i32
    %c0_i32_0 = arith.constant 0 : i32
    %c0_i32_1 = arith.constant 0 : i32
    return %c0_i32, %c0_i32_0 : i32, i32
  }
  func.func @transform_6(%arg0: i32) -> (i32, i32) {
    %c0_i32 = arith.constant 0 : i32
    %c0_i32_0 = arith.constant 0 : i32
    return %arg0, %c0_i32 : i32, i32
  }
}

</mosaic_0001>

<llo_original>
// kernel: tpu_custom_call.1
$region0: #{tpu_custom_call.1}
  #allocation0 [shape = 'u32[]', space=smem, size = 0x4, offset = 0x4, fixed_abs, tag = 'smem constant byte address 0x4 - core index']
  #allocation1 [shape = 'u32[144,128]{1,0:T(1,128)}', space=vmem, size = 0x12000, scoped, tag = 'internal scratch']
  %s0 = inlined_call_operand.hbm [shape: f32[8,128], index: 0, kind: input, shape index: {}]
  %s1 = inlined_call_operand.hbm [shape: f32[8,32], index: 1, kind: input, shape index: {}]
  %s2 = inlined_call_operand.hbm [shape: f32[32,128], index: 2, kind: input, shape index: {}]
  %s3 = inlined_call_operand.vmem [shape: f32[1,128], index: 3, kind: input, shape index: {}]
  %s4 = inlined_call_operand.hbm [shape: f32[32,128], index: 4, kind: input, shape index: {}]
  %s5 = inlined_call_operand.vmem [shape: f32[1,128], index: 5, kind: input, shape index: {}]
  %s6 = inlined_call_operand.hbm [shape: f32[8,128], index: 6, kind: output, shape index: {}]
  %s7 = sld [smem:[#allocation0]]
  $region50: #{tpu_custom_call.1} parent=0
    _
  %s9 = ssub.s32 1, %s7
  %s10 = scalar_select 0, %s9, %s7
  $region1: #{tpu_custom_call.1} parent=0
    #allocation2 [shape = 'u8[4096]{0}', space=vmem, size = 0x1000, scoped, tag = 'input window, operand 0, single buffered']
    #allocation3 [shape = 's32[1]{0}', space=sflag, size = 0x4, scoped, tag = 'scoped memory for tpu_custom_call.1']
    #allocation4 [shape = 's32[1]{0}', space=sflag, size = 0x4, scoped, tag = 'scoped memory for tpu_custom_call.1']
    #allocation5 [shape = 'u8[4096]{0}', space=vmem, size = 0x1000, scoped, tag = 'input window, operand 1, single buffered']
    #allocation6 [shape = 's32[1]{0}', space=sflag, size = 0x4, scoped, tag = 'scoped memory for tpu_custom_call.1']
    #allocation7 [shape = 'u8[16384]{0}', space=vmem, size = 0x4000, scoped, tag = 'input window, operand 2, single buffered']
    #allocation8 [shape = 'u8[16384]{0}', space=vmem, size = 0x4000, scoped, tag = 'input window, operand 4, single buffered']
    #allocation9 [shape = 's32[1]{0}', space=sflag, size = 0x4, scoped, tag = 'scoped memory for tpu_custom_call.1']
    #allocation10 [shape = 'u8[4096]{0}', space=vmem, size = 0x1000, scoped, tag = 'output window, operand 0, single buffered']
    %11 = vsyncpa [#allocation3], 0
    %12 = vsyncpa [#allocation6], 0
    %13 = vsyncpa [#allocation9], 0
    %14 = vsyncpa [#allocation4], 0
    // Predicated region
    $region2: #{tpu_custom_call.1} parent=1 // pred_check
      _
    $region3: #{tpu_custom_call.1} parent=1 // pred_check_branch
      %16 = sbr.rel (0) target = $region5
    $region4: #{tpu_custom_call.1} parent=1 // pred_region
      %s18 = ssub.s32 128, 128
      %19 = vsyncadd [#allocation3], %s18
      %s21 = sshll.u32 [#allocation2], 4
      %s22 = int_to_ptr.vmem [resolvable:$true] %s21
      %24 = dma.hbm_to_vmem [thread:$0]  %s0, 128, %s22, [#allocation3]
    $region5: #{tpu_custom_call.1} parent=1 // pred_fallthru
      _
    // Predicated region
    $region6: #{tpu_custom_call.1} parent=1 // pred_check
      _
    $region7: #{tpu_custom_call.1} parent=1 // pred_check_branch
      %26 = sbr.rel (0) target = $region9
    $region8: #{tpu_custom_call.1} parent=1 // pred_region
      %s28 = ssub.s32 128, 128
      %29 = vsyncadd [#allocation6], %s28
      %s31 = sshll.u32 [#allocation5], 4
      %s32 = int_to_ptr.vmem [resolvable:$true] %s31
      %34 = dma.hbm_to_vmem [thread:$0]  %s1, 128, %s32, [#allocation6]
    $region9: #{tpu_custom_call.1} parent=1 // pred_fallthru
      _
    // Predicated region
    $region10: #{tpu_custom_call.1} parent=1 // pred_check
      _
    $region11: #{tpu_custom_call.1} parent=1 // pred_check_branch
      %36 = sbr.rel (0) target = $region13
    $region12: #{tpu_custom_call.1} parent=1 // pred_region
      %s38 = ssub.s32 512, 512
      %39 = vsyncadd [#allocation6], %s38
      %s40 = sshll.u32 [#allocation7], 4
      %s41 = int_to_ptr.vmem [resolvable:$true] %s40
      %46 = dma.hbm_to_vmem [thread:$0]  %s2, 512, %s41, [#allocation6], 128, 128, 8
    $region13: #{tpu_custom_call.1} parent=1 // pred_fallthru
      _
    // Predicated region
    $region14: #{tpu_custom_call.1} parent=1 // pred_check
      _
    $region15: #{tpu_custom_call.1} parent=1 // pred_check_branch
      %48 = sbr.rel (0) target = $region17
    $region16: #{tpu_custom_call.1} parent=1 // pred_region
      _
    $region17: #{tpu_custom_call.1} parent=1 // pred_fallthru
      _
    // Predicated region
    $region18: #{tpu_custom_call.1} parent=1 // pred_check
      _
    $region19: #{tpu_custom_call.1} parent=1 // pred_check_branch
      %50 = sbr.rel (0) target = $region21
    $region20: #{tpu_custom_call.1} parent=1 // pred_region
      %s52 = ssub.s32 512, 512
      %53 = vsyncadd [#allocation9], %s52
      %s54 = sshll.u32 [#allocation8], 4
      %s55 = int_to_ptr.vmem [resolvable:$true] %s54
      %60 = dma.hbm_to_vmem [thread:$0]  %s4, 512, %s55, [#allocation9], 128, 128, 8
    $region21: #{tpu_custom_call.1} parent=1 // pred_fallthru
      _
    // Predicated region
    $region22: #{tpu_custom_call.1} parent=1 // pred_check
      _
    $region23: #{tpu_custom_call.1} parent=1 // pred_check_branch
      %62 = sbr.rel (0) target = $region25
    $region24: #{tpu_custom_call.1} parent=1 // pred_region
      _
    $region25: #{tpu_custom_call.1} parent=1 // pred_fallthru
      _
    // Predicated region
    $region26: #{tpu_custom_call.1} parent=1 // pred_check
      _
    $region27: #{tpu_custom_call.1} parent=1 // pred_check_branch
      %64 = sbr.rel (0) target = $region29
    $region28: #{tpu_custom_call.1} parent=1 // pred_region
      %65 = dma.done [#allocation3], 128
    $region29: #{tpu_custom_call.1} parent=1 // pred_fallthru
      _
    // Predicated region
    $region30: #{tpu_custom_call.1} parent=1 // pred_check
      _
    $region31: #{tpu_custom_call.1} parent=1 // pred_check_branch
      %67 = sbr.rel (0) target = $region33
    $region32: #{tpu_custom_call.1} parent=1 // pred_region
      %68 = dma.done [#allocation6], 128
    $region33: #{tpu_custom_call.1} parent=1 // pred_fallthru
      _
    // Predicated region
    $region34: #{tpu_custom_call.1} parent=1 // pred_check
      _
    $region35: #{tpu_custom_call.1} parent=1 // pred_check_branch
      %70 = sbr.rel (0) target = $region37
    $region36: #{tpu_custom_call.1} parent=1 // pred_region
      %71 = dma.done [#allocation6], 512
    $region37: #{tpu_custom_call.1} parent=1 // pred_fallthru
      _
    // Predicated region
    $region38: #{tpu_custom_call.1} parent=1 // pred_check
      _
    $region39: #{tpu_custom_call.1} parent=1 // pred_check_branch
      %73 = sbr.rel (0) target = $region41
    $region40: #{tpu_custom_call.1} parent=1 // pred_region
      %74 = dma.done [#allocation9], 512
    $region41: #{tpu_custom_call.1} parent=1 // pred_fallthru
      _
    %v75 = vld [vmem:[#allocation5] sm:$0xff]
    %v76 = vld [vmem:[#allocation7] sm:$0xff]
    %v77 = vld [vmem:[#allocation7 + $0x8] sm:$0xff]
    %v78 = vld [vmem:[#allocation7 + $0x10] sm:$0xff]
    %v79 = vld [vmem:[#allocation7 + $0x18] sm:$0xff]
    %v80 = vld [vmem:[%s3] sm:$0x1]
    %v82 = vlaneseq
    %v83 = vshrl.u32 %v82, 7
    %v84 = vsub.s32 0, %v83
    %v85 = vrot.slane %v80, %v84
    %vm87 = vcmask 261120
    %v89 = vsel %vm87, %v75, 0
    %91 = vmatprep.subr.mxu0 0.0
    %92 = vmatpush1.msra.mxu0 %v76
    %93 = vmatprep.subr.mxu0 0.0
    %94 = vmatpush1.msra.mxu0 %v77
    %95 = vmatprep.subr.mxu0 0.0
    %96 = vmatpush1.msra.mxu0 %v78
    %97 = vmatprep.subr.mxu0 0.0
    %98 = vmatpush1.msra.mxu0 %v79
    %99 = vmatprep.subr.mxu0 0.0
    %100 = vmatpush1.msra.mxu0 0.0
    %101 = vmatprep.subr.mxu0 0.0
    %102 = vmatpush1.msra.mxu0 0.0
    %103 = vmatprep.subr.mxu0 0.0
    %104 = vmatpush1.msra.mxu0 0.0
    %105 = vmatprep.subr.mxu0 0.0
    %106 = vmatpush1.msra.mxu0 0.0
    %107 = vmatprep.subr.mxu0 0.0
    %108 = vmatpush1.msra.mxu0 0.0
    %109 = vmatprep.subr.mxu0 0.0
    %110 = vmatpush1.msra.mxu0 0.0
    %111 = vmatprep.subr.mxu0 0.0
    %112 = vmatpush1.msra.mxu0 0.0
    %113 = vmatprep.subr.mxu0 0.0
    %114 = vmatpush1.msra.mxu0 0.0
    %115 = vmatprep.subr.mxu0 0.0
    %116 = vmatpush1.msra.mxu0 0.0
    %117 = vmatprep.subr.mxu0 0.0
    %118 = vmatpush1.msra.mxu0 0.0
    %119 = vmatprep.subr.mxu0 0.0
    %120 = vmatpush1.msra.mxu0 0.0
    %121 = vmatprep.subr.mxu0 0.0
    %122 = vmatpush1.msra.mxu0 0.0
    %123 = vmatprep.subr.mxu0 0.0
    %124 = vmatpush1.msra.mxu0 0.0
    %125 = vmatprep.subr.mxu0 0.0
    %126 = vmatpush1.msra.mxu0 0.0
    %127 = vmatprep.subr.mxu0 0.0
    %128 = vmatpush1.msra.mxu0 0.0
    %129 = vmatprep.subr.mxu0 0.0
    %130 = vmatpush1.msra.mxu0 0.0
    %131 = vmatprep.subr.mxu0 0.0
    %132 = vmatpush1.msra.mxu0 0.0
    %133 = vmatprep.subr.mxu0 0.0
    %134 = vmatpush1.msra.mxu0 0.0
    %135 = vmatprep.subr.mxu0 0.0
    %136 = vmatpush1.msra.mxu0 0.0
    %137 = vmatprep.subr.mxu0 0.0
    %138 = vmatpush1.msra.mxu0 0.0
    %139 = vmatprep.subr.mxu0 0.0
    %140 = vmatpush1.msra.mxu0 0.0
    %141 = vmatprep.subr.mxu0 0.0
    %142 = vmatpush1.msra.mxu0 0.0
    %143 = vmatprep.subr.mxu0 0.0
    %144 = vmatpush1.msra.mxu0 0.0
    %145 = vmatprep.subr.mxu0 0.0
    %146 = vmatpush1.msra.mxu0 0.0
    %147 = vmatprep.subr.mxu0 0.0
    %148 = vmatpush1.msra.mxu0 0.0
    %149 = vmatprep.subr.mxu0 0.0
    %150 = vmatpush1.msra.mxu0 0.0
    %151 = vmatprep.subr.mxu0 0.0
    %152 = vmatpush1.msra.mxu0 0.0
    %153 = vmatprep.subr.mxu0 0.0
    %154 = vmatpush1.msra.mxu0 0.0
    %155 = vmatprep.mubr.f32.mxu0 0.0
    %156 = vmatmul.mubr.f32.gmra.mrb[0].mxu0 %v89
    %v157 = vpop.f32.mrb[0].mxu0
    %v158 = vadd.f32 %v85, %v157
    %v159 = vpop.f32.mrb[0].mxu0
    %160 = vdwg.mxu0
    %v161 = vld [vmem:[#allocation8] sm:$0xff]
    %v162 = vld [vmem:[#allocation8 + $0x8] sm:$0xff]
    %v163 = vld [vmem:[#allocation8 + $0x10] sm:$0xff]
    %v164 = vld [vmem:[#allocation8 + $0x18] sm:$0xff]
    %v165 = vld [vmem:[%s5] sm:$0x1]
    %v167 = vlaneseq
    %v168 = vshrl.u32 %v167, 7
    %v169 = vsub.s32 0, %v168
    %v170 = vrot.slane %v165, %v169
    %172 = vmatprep.subr.mxu0 0.0
    %173 = vmatpush1.msra.mxu0 %v161
    %174 = vmatprep.subr.mxu0 0.0
    %175 = vmatpush1.msra.mxu0 %v162
    %176 = vmatprep.subr.mxu0 0.0
    %177 = vmatpush1.msra.mxu0 %v163
    %178 = vmatprep.subr.mxu0 0.0
    %179 = vmatpush1.msra.mxu0 %v164
    %180 = vmatprep.subr.mxu0 0.0
    %181 = vmatpush1.msra.mxu0 0.0
    %182 = vmatprep.subr.mxu0 0.0
    %183 = vmatpush1.msra.mxu0 0.0
    %184 = vmatprep.subr.mxu0 0.0
    %185 = vmatpush1.msra.mxu0 0.0
    %186 = vmatprep.subr.mxu0 0.0
    %187 = vmatpush1.msra.mxu0 0.0
    %188 = vmatprep.subr.mxu0 0.0
    %189 = vmatpush1.msra.mxu0 0.0
    %190 = vmatprep.subr.mxu0 0.0
    %191 = vmatpush1.msra.mxu0 0.0
    %192 = vmatprep.subr.mxu0 0.0
    %193 = vmatpush1.msra.mxu0 0.0
    %194 = vmatprep.subr.mxu0 0.0
    %195 = vmatpush1.msra.mxu0 0.0
    %196 = vmatprep.subr.mxu0 0.0
    %197 = vmatpush1.msra.mxu0 0.0
    %198 = vmatprep.subr.mxu0 0.0
    %199 = vmatpush1.msra.mxu0 0.0
    %200 = vmatprep.subr.mxu0 0.0
    %201 = vmatpush1.msra.mxu0 0.0
    %202 = vmatprep.subr.mxu0 0.0
    %203 = vmatpush1.msra.mxu0 0.0
    %204 = vmatprep.subr.mxu0 0.0
    %205 = vmatpush1.msra.mxu0 0.0
    %206 = vmatprep.subr.mxu0 0.0
    %207 = vmatpush1.msra.mxu0 0.0
    %208 = vmatprep.subr.mxu0 0.0
    %209 = vmatpush1.msra.mxu0 0.0
    %210 = vmatprep.subr.mxu0 0.0
    %211 = vmatpush1.msra.mxu0 0.0
    %212 = vmatprep.subr.mxu0 0.0
    %213 = vmatpush1.msra.mxu0 0.0
    %214 = vmatprep.subr.mxu0 0.0
    %215 = vmatpush1.msra.mxu0 0.0
    %216 = vmatprep.subr.mxu0 0.0
    %217 = vmatpush1.msra.mxu0 0.0
    %218 = vmatprep.subr.mxu0 0.0
    %219 = vmatpush1.msra.mxu0 0.0
    %220 = vmatprep.subr.mxu0 0.0
    %221 = vmatpush1.msra.mxu0 0.0
    %222 = vmatprep.subr.mxu0 0.0
    %223 = vmatpush1.msra.mxu0 0.0
    %224 = vmatprep.subr.mxu0 0.0
    %225 = vmatpush1.msra.mxu0 0.0
    %226 = vmatprep.subr.mxu0 0.0
    %227 = vmatpush1.msra.mxu0 0.0
    %228 = vmatprep.subr.mxu0 0.0
    %229 = vmatpush1.msra.mxu0 0.0
    %230 = vmatprep.subr.mxu0 0.0
    %231 = vmatpush1.msra.mxu0 0.0
    %232 = vmatprep.subr.mxu0 0.0
    %233 = vmatpush1.msra.mxu0 0.0
    %234 = vmatprep.subr.mxu0 0.0
    %235 = vmatpush1.msra.mxu0 0.0
    %236 = vmatprep.mubr.f32.mxu0 0.0
    %237 = vmatmul.mubr.f32.gmra.mrb[0].mxu0 %v89
    %v238 = vpop.f32.mrb[0].mxu0
    %v239 = vadd.f32 %v170, %v238
    %v240 = vpop.f32.mrb[0].mxu0
    %241 = vdwg.mxu0
    %v242 = vld [vmem:[#allocation2] sm:$0xff]
    %v243 = vmul.f32 %v158, %v242
    %v244 = vadd.f32 %v243, %v239
    %245 = vst [vmem:[#allocation10] sm:$0xff] %v244
    // Predicated region
    $region42: #{tpu_custom_call.1} parent=1 // pred_check
      _
    $region43: #{tpu_custom_call.1} parent=1 // pred_check_branch
      %247 = sbr.rel (0) target = $region45
    $region44: #{tpu_custom_call.1} parent=1 // pred_region
      %s249 = ssub.s32 128, 128
      %250 = vsyncadd [#allocation4], %s249
      %s252 = sshll.u32 [#allocation10], 4
      %s253 = int_to_ptr.vmem [resolvable:$true] %s252
      %255 = dma.vmem_to_hbm [thread:$0]  %s253, 128, %s6, [#allocation4]
    $region45: #{tpu_custom_call.1} parent=1 // pred_fallthru
      _
    // Predicated region
    $region46: #{tpu_custom_call.1} parent=1 // pred_check
      _
    $region47: #{tpu_custom_call.1} parent=1 // pred_check_branch
      %257 = sbr.rel (0) target = $region49
    $region48: #{tpu_custom_call.1} parent=1 // pred_region
      %258 = dma.done [#allocation4], 128
    $region49: #{tpu_custom_call.1} parent=1 // pred_fallthru
      _
    %259 = vsyncpa [#allocation3], 1
    %260 = vsyncpa [#allocation6], 1
    %261 = vsyncpa [#allocation9], 1
    %262 = vsyncpa [#allocation4], 1

// kernel: tpu_custom_call.1
$region0: #{tpu_custom_call.1}
  #allocation0 [shape = 'u32[]', space=smem, size = 0x4, offset = 0x4, fixed_abs, tag = 'smem constant byte address 0x4 - core index']
  #allocation1 [shape = 'u32[144,128]{1,0:T(1,128)}', space=vmem, size = 0x12000, scoped, tag = 'internal scratch']
  %s0 = inlined_call_operand.hbm [shape: f32[8,128], index: 0, kind: input, shape index: {}]
  %s1 = inlined_call_operand.hbm [shape: f32[8,32], index: 1, kind: input, shape index: {}]
  %s2 = inlined_call_operand.hbm [shape: f32[32,128], index: 2, kind: input, shape index: {}]
  %s3 = inlined_call_operand.vmem [shape: f32[1,128], index: 3, kind: input, shape index: {}]
  %s4 = inlined_call_operand.hbm [shape: f32[32,128], index: 4, kind: input, shape index: {}]
  %s5 = inlined_call_operand.vmem [shape: f32[1,128], index: 5, kind: input, shape index: {}]
  %s6 = inlined_call_operand.hbm [shape: f32[8,128], index: 6, kind: output, shape index: {}]
  %s7 = sld [smem:[#allocation0]]
  $region50: #{tpu_custom_call.1} parent=0
    _
  %s9 = ssub.s32 1, %s7
  %s10 = scalar_select 0, %s9, %s7
  $region1: #{tpu_custom_call.1} parent=0
    #allocation2 [shape = 'u8[4096]{0}', space=vmem, size = 0x1000, scoped, tag = 'input window, operand 0, single buffered']
    #allocation3 [shape = 's32[1]{0}', space=sflag, size = 0x4, scoped, tag = 'scoped memory for tpu_custom_call.1']
    #allocation4 [shape = 's32[1]{0}', space=sflag, size = 0x4, scoped, tag = 'scoped memory for tpu_custom_call.1']
    #allocation5 [shape = 'u8[4096]{0}', space=vmem, size = 0x1000, scoped, tag = 'input window, operand 1, single buffered']
    #allocation6 [shape = 's32[1]{0}', space=sflag, size = 0x4, scoped, tag = 'scoped memory for tpu_custom_call.1']
    #allocation7 [shape = 'u8[16384]{0}', space=vmem, size = 0x4000, scoped, tag = 'input window, operand 2, single buffered']
    #allocation8 [shape = 'u8[16384]{0}', space=vmem, size = 0x4000, scoped, tag = 'input window, operand 4, single buffered']
    #allocation9 [shape = 's32[1]{0}', space=sflag, size = 0x4, scoped, tag = 'scoped memory for tpu_custom_call.1']
    #allocation10 [shape = 'u8[4096]{0}', space=vmem, size = 0x1000, scoped, tag = 'output window, operand 0, single buffered']
    %11 = vsyncpa [#allocation3], 0
    %12 = vsyncpa [#allocation6], 0
    %13 = vsyncpa [#allocation9], 0
    %14 = vsyncpa [#allocation4], 0
    // Predicated region
    $region2: #{tpu_custom_call.1} parent=1 // pred_check
      _
    $region3: #{tpu_custom_call.1} parent=1 // pred_check_branch
      %16 = sbr.rel (0) target = $region5
    $region4: #{tpu_custom_call.1} parent=1 // pred_region
      %s18 = ssub.s32 128, 128
      %19 = vsyncadd [#allocation3], %s18
      %s21 = sshll.u32 [#allocation2], 4
      %s22 = int_to_ptr.vmem [resolvable:$true] %s21
      %24 = dma.hbm_to_vmem [thread:$0]  %s0, 128, %s22, [#allocation3]
    $region5: #{tpu_custom_call.1} parent=1 // pred_fallthru
      _
    // Predicated region
    $region6: #{tpu_custom_call.1} parent=1 // pred_check
      _
    $region7: #{tpu_custom_call.1} parent=1 // pred_check_branch
      %26 = sbr.rel (0) target = $region9
    $region8: #{tpu_custom_call.1} parent=1 // pred_region
      %s28 = ssub.s32 128, 128
      %29 = vsyncadd [#allocation6], %s28
      %s31 = sshll.u32 [#allocation5], 4
      %s32 = int_to_ptr.vmem [resolvable:$true] %s31
      %34 = dma.hbm_to_vmem [thread:$0]  %s1, 128, %s32, [#allocation6]
    $region9: #{tpu_custom_call.1} parent=1 // pred_fallthru
      _
    // Predicated region
    $region10: #{tpu_custom_call.1} parent=1 // pred_check
      _
    $region11: #{tpu_custom_call.1} parent=1 // pred_check_branch
      %36 = sbr.rel (0) target = $region13
    $region12: #{tpu_custom_call.1} parent=1 // pred_region
      %s38 = ssub.s32 512, 512
      %39 = vsyncadd [#allocation6], %s38
      %s40 = sshll.u32 [#allocation7], 4
      %s41 = int_to_ptr.vmem [resolvable:$true] %s40
      %46 = dma.hbm_to_vmem [thread:$0]  %s2, 512, %s41, [#allocation6], 128, 128, 8
    $region13: #{tpu_custom_call.1} parent=1 // pred_fallthru
      _
    // Predicated region
    $region14: #{tpu_custom_call.1} parent=1 // pred_check
      _
    $region15: #{tpu_custom_call.1} parent=1 // pred_check_branch
      %48 = sbr.rel (0) target = $region17
    $region16: #{tpu_custom_call.1} parent=1 // pred_region
      _
    $region17: #{tpu_custom_call.1} parent=1 // pred_fallthru
      _
    // Predicated region
    $region18: #{tpu_custom_call.1} parent=1 // pred_check
      _
    $region19: #{tpu_custom_call.1} parent=1 // pred_check_branch
      %50 = sbr.rel (0) target = $region21
    $region20: #{tpu_custom_call.1} parent=1 // pred_region
      %s52 = ssub.s32 512, 512
      %53 = vsyncadd [#allocation9], %s52
      %s54 = sshll.u32 [#allocation8], 4
      %s55 = int_to_ptr.vmem [resolvable:$true] %s54
      %60 = dma.hbm_to_vmem [thread:$0]  %s4, 512, %s55, [#allocation9], 128, 128, 8
    $region21: #{tpu_custom_call.1} parent=1 // pred_fallthru
      _
    // Predicated region
    $region22: #{tpu_custom_call.1} parent=1 // pred_check
      _
    $region23: #{tpu_custom_call.1} parent=1 // pred_check_branch
      %62 = sbr.rel (0) target = $region25
    $region24: #{tpu_custom_call.1} parent=1 // pred_region
      _
    $region25: #{tpu_custom_call.1} parent=1 // pred_fallthru
      _
    // Predicated region
    $region26: #{tpu_custom_call.1} parent=1 // pred_check
      _
    $region27: #{tpu_custom_call.1} parent=1 // pred_check_branch
      %64 = sbr.rel (0) target = $region29
    $region28: #{tpu_custom_call.1} parent=1 // pred_region
      %65 = dma.done [#allocation3], 128
    $region29: #{tpu_custom_call.1} parent=1 // pred_fallthru
      _
    // Predicated region
    $region30: #{tpu_custom_call.1} parent=1 // pred_check
      _
    $region31: #{tpu_custom_call.1} parent=1 // pred_check_branch
      %67 = sbr.rel (0) target = $region33
    $region32: #{tpu_custom_call.1} parent=1 // pred_region
      %68 = dma.done [#allocation6], 128
    $region33: #{tpu_custom_call.1} parent=1 // pred_fallthru
      _
    // Predicated region
    $region34: #{tpu_custom_call.1} parent=1 // pred_check
      _
    $region35: #{tpu_custom_call.1} parent=1 // pred_check_branch
      %70 = sbr.rel (0) target = $region37
    $region36: #{tpu_custom_call.1} parent=1 // pred_region
      %71 = dma.done [#allocation6], 512
    $region37: #{tpu_custom_call.1} parent=1 // pred_fallthru
      _
    // Predicated region
    $region38: #{tpu_custom_call.1} parent=1 // pred_check
      _
    $region39: #{tpu_custom_call.1} parent=1 // pred_check_branch
      %73 = sbr.rel (0) target = $region41
    $region40: #{tpu_custom_call.1} parent=1 // pred_region
      %74 = dma.done [#allocation9], 512
    $region41: #{tpu_custom_call.1} parent=1 // pred_fallthru
      _
    %v75 = vld [vmem:[#allocation5] sm:$0xff]
    %v76 = vld [vmem:[#allocation7] sm:$0xff]
    %v77 = vld [vmem:[#allocation7 + $0x8] sm:$0xff]
    %v78 = vld [vmem:[#allocation7 + $0x10] sm:$0xff]
    %v79 = vld [vmem:[#allocation7 + $0x18] sm:$0xff]
    %v80 = vld [vmem:[%s3] sm:$0x1]
    %v82 = vlaneseq
    %v83 = vshrl.u32 %v82, 7
    %v84 = vsub.s32 0, %v83
    %v85 = vrot.slane %v80, %v84
    %vm87 = vcmask 261120
    %v89 = vsel %vm87, %v75, 0
    %91 = vmatprep.subr.mxu0 0.0
    %92 = vmatpush1.msra.mxu0 %v76
    %93 = vmatprep.subr.mxu0 0.0
    %94 = vmatpush1.msra.mxu0 %v77
    %95 = vmatprep.subr.mxu0 0.0
    %96 = vmatpush1.msra.mxu0 %v78
    %97 = vmatprep.subr.mxu0 0.0
    %98 = vmatpush1.msra.mxu0 %v79
    %99 = vmatprep.subr.mxu0 0.0
    %100 = vmatpush1.msra.mxu0 0.0
    %101 = vmatprep.subr.mxu0 0.0
    %102 = vmatpush1.msra.mxu0 0.0
    %103 = vmatprep.subr.mxu0 0.0
    %104 = vmatpush1.msra.mxu0 0.0
    %105 = vmatprep.subr.mxu0 0.0
    %106 = vmatpush1.msra.mxu0 0.0
    %107 = vmatprep.subr.mxu0 0.0
    %108 = vmatpush1.msra.mxu0 0.0
    %109 = vmatprep.subr.mxu0 0.0
    %110 = vmatpush1.msra.mxu0 0.0
    %111 = vmatprep.subr.mxu0 0.0
    %112 = vmatpush1.msra.mxu0 0.0
    %113 = vmatprep.subr.mxu0 0.0
    %114 = vmatpush1.msra.mxu0 0.0
    %115 = vmatprep.subr.mxu0 0.0
    %116 = vmatpush1.msra.mxu0 0.0
    %117 = vmatprep.subr.mxu0 0.0
    %118 = vmatpush1.msra.mxu0 0.0
    %119 = vmatprep.subr.mxu0 0.0
    %120 = vmatpush1.msra.mxu0 0.0
    %121 = vmatprep.subr.mxu0 0.0
    %122 = vmatpush1.msra.mxu0 0.0
    %123 = vmatprep.subr.mxu0 0.0
    %124 = vmatpush1.msra.mxu0 0.0
    %125 = vmatprep.subr.mxu0 0.0
    %126 = vmatpush1.msra.mxu0 0.0
    %127 = vmatprep.subr.mxu0 0.0
    %128 = vmatpush1.msra.mxu0 0.0
    %129 = vmatprep.subr.mxu0 0.0
    %130 = vmatpush1.msra.mxu0 0.0
    %131 = vmatprep.subr.mxu0 0.0
    %132 = vmatpush1.msra.mxu0 0.0
    %133 = vmatprep.subr.mxu0 0.0
    %134 = vmatpush1.msra.mxu0 0.0
    %135 = vmatprep.subr.mxu0 0.0
    %136 = vmatpush1.msra.mxu0 0.0
    %137 = vmatprep.subr.mxu0 0.0
    %138 = vmatpush1.msra.mxu0 0.0
    %139 = vmatprep.subr.mxu0 0.0
    %140 = vmatpush1.msra.mxu0 0.0
    %141 = vmatprep.subr.mxu0 0.0
    %142 = vmatpush1.msra.mxu0 0.0
    %143 = vmatprep.subr.mxu0 0.0
    %144 = vmatpush1.msra.mxu0 0.0
    %145 = vmatprep.subr.mxu0 0.0
    %146 = vmatpush1.msra.mxu0 0.0
    %147 = vmatprep.subr.mxu0 0.0
    %148 = vmatpush1.msra.mxu0 0.0
    %149 = vmatprep.subr.mxu0 0.0
    %150 = vmatpush1.msra.mxu0 0.0
    %151 = vmatprep.subr.mxu0 0.0
    %152 = vmatpush1.msra.mxu0 0.0
    %153 = vmatprep.subr.mxu0 0.0
    %154 = vmatpush1.msra.mxu0 0.0
    %155 = vmatprep.mubr.f32.mxu0 0.0
    %156 = vmatmul.mubr.f32.gmra.mrb[0].mxu0 %v89
    %v157 = vpop.f32.mrb[0].mxu0
    %v158 = vadd.f32 %v85, %v157
    %v159 = vpop.f32.mrb[0].mxu0
    %160 = vdwg.mxu0
    %v161 = vld [vmem:[#allocation8] sm:$0xff]
    %v162 = vld [vmem:[#allocation8 + $0x8] sm:$0xff]
    %v163 = vld [vmem:[#allocation8 + $0x10] sm:$0xff]
    %v164 = vld [vmem:[#allocation8 + $0x18] sm:$0xff]
    %v165 = vld [vmem:[%s5] sm:$0x1]
    %v167 = vlaneseq
    %v168 = vshrl.u32 %v167, 7
    %v169 = vsub.s32 0, %v168
    %v170 = vrot.slane %v165, %v169
    %172 = vmatprep.subr.mxu0 0.0
    %173 = vmatpush1.msra.mxu0 %v161
    %174 = vmatprep.subr.mxu0 0.0
    %175 = vmatpush1.msra.mxu0 %v162
    %176 = vmatprep.subr.mxu0 0.0
    %177 = vmatpush1.msra.mxu0 %v163
    %178 = vmatprep.subr.mxu0 0.0
    %179 = vmatpush1.msra.mxu0 %v164
    %180 = vmatprep.subr.mxu0 0.0
    %181 = vmatpush1.msra.mxu0 0.0
    %182 = vmatprep.subr.mxu0 0.0
    %183 = vmatpush1.msra.mxu0 0.0
    %184 = vmatprep.subr.mxu0 0.0
    %185 = vmatpush1.msra.mxu0 0.0
    %186 = vmatprep.subr.mxu0 0.0
    %187 = vmatpush1.msra.mxu0 0.0
    %188 = vmatprep.subr.mxu0 0.0
    %189 = vmatpush1.msra.mxu0 0.0
    %190 = vmatprep.subr.mxu0 0.0
    %191 = vmatpush1.msra.mxu0 0.0
    %192 = vmatprep.subr.mxu0 0.0
    %193 = vmatpush1.msra.mxu0 0.0
    %194 = vmatprep.subr.mxu0 0.0
    %195 = vmatpush1.msra.mxu0 0.0
    %196 = vmatprep.subr.mxu0 0.0
    %197 = vmatpush1.msra.mxu0 0.0
    %198 = vmatprep.subr.mxu0 0.0
    %199 = vmatpush1.msra.mxu0 0.0
    %200 = vmatprep.subr.mxu0 0.0
    %201 = vmatpush1.msra.mxu0 0.0
    %202 = vmatprep.subr.mxu0 0.0
    %203 = vmatpush1.msra.mxu0 0.0
    %204 = vmatprep.subr.mxu0 0.0
    %205 = vmatpush1.msra.mxu0 0.0
    %206 = vmatprep.subr.mxu0 0.0
    %207 = vmatpush1.msra.mxu0 0.0
    %208 = vmatprep.subr.mxu0 0.0
    %209 = vmatpush1.msra.mxu0 0.0
    %210 = vmatprep.subr.mxu0 0.0
    %211 = vmatpush1.msra.mxu0 0.0
    %212 = vmatprep.subr.mxu0 0.0
    %213 = vmatpush1.msra.mxu0 0.0
    %214 = vmatprep.subr.mxu0 0.0
    %215 = vmatpush1.msra.mxu0 0.0
    %216 = vmatprep.subr.mxu0 0.0
    %217 = vmatpush1.msra.mxu0 0.0
    %218 = vmatprep.subr.mxu0 0.0
    %219 = vmatpush1.msra.mxu0 0.0
    %220 = vmatprep.subr.mxu0 0.0
    %221 = vmatpush1.msra.mxu0 0.0
    %222 = vmatprep.subr.mxu0 0.0
    %223 = vmatpush1.msra.mxu0 0.0
    %224 = vmatprep.subr.mxu0 0.0
    %225 = vmatpush1.msra.mxu0 0.0
    %226 = vmatprep.subr.mxu0 0.0
    %227 = vmatpush1.msra.mxu0 0.0
    %228 = vmatprep.subr.mxu0 0.0
    %229 = vmatpush1.msra.mxu0 0.0
    %230 = vmatprep.subr.mxu0 0.0
    %231 = vmatpush1.msra.mxu0 0.0
    %232 = vmatprep.subr.mxu0 0.0
    %233 = vmatpush1.msra.mxu0 0.0
    %234 = vmatprep.subr.mxu0 0.0
    %235 = vmatpush1.msra.mxu0 0.0
    %236 = vmatprep.mubr.f32.mxu0 0.0
    %237 = vmatmul.mubr.f32.gmra.mrb[0].mxu0 %v89
    %v238 = vpop.f32.mrb[0].mxu0
    %v239 = vadd.f32 %v170, %v238
    %v240 = vpop.f32.mrb[0].mxu0
    %241 = vdwg.mxu0
    %v242 = vld [vmem:[#allocation2] sm:$0xff]
    %v243 = vmul.f32 %v158, %v242
    %v244 = vadd.f32 %v243, %v239
    %245 = vst [vmem:[#allocation10] sm:$0xff] %v244
    // Predicated region
    $region42: #{tpu_custom_call.1} parent=1 // pred_check
      _
    $region43: #{tpu_custom_call.1} parent=1 // pred_check_branch
      %247 = sbr.rel (0) target = $region45
    $region44: #{tpu_custom_call.1} parent=1 // pred_region
      %s249 = ssub.s32 128, 128
      %250 = vsyncadd [#allocation4], %s249
      %s252 = sshll.u32 [#allocation10], 4
      %s253 = int_to_ptr.vmem [resolvable:$true] %s252
      %255 = dma.vmem_to_hbm [thread:$0]  %s253, 128, %s6, [#allocation4]
    $region45: #{tpu_custom_call.1} parent=1 // pred_fallthru
      _
    // Predicated region
    $region46: #{tpu_custom_call.1} parent=1 // pred_check
      _
    $region47: #{tpu_custom_call.1} parent=1 // pred_check_branch
      %257 = sbr.rel (0) target = $region49
    $region48: #{tpu_custom_call.1} parent=1 // pred_region
      %258 = dma.done [#allocation4], 128
    $region49: #{tpu_custom_call.1} parent=1 // pred_fallthru
      _
    %259 = vsyncpa [#allocation3], 1
    %260 = vsyncpa [#allocation6], 1
    %261 = vsyncpa [#allocation9], 1
    %262 = vsyncpa [#allocation4], 1

</llo_original>
